<compile_context>
chip_gen: v7x
topology: tpu7x:2x2x1
jax: 0.10.0
libtpu: 0.0.40
codegen_flags: <defaults>
</compile_context>

<pallas_src>
import functools
import math

import jax
import jax.numpy as jnp
from jax.experimental import pallas as pl
from jax.experimental.pallas import tpu as pltpu


def _round_up(x, m):
    return (x + m - 1) // m * m


def _quantile_loss_kernel(*refs, a_coefs, b_coefs, scale, has_sw):
    # refs: y_true (TR, L); y_pred (Q, TR, L); [sample_weight (TR, L)]; out (TR, L)
    if has_sw:
        y_true_ref, y_pred_ref, sw_ref, out_ref = refs
    else:
        y_true_ref, y_pred_ref, out_ref = refs

    y_true = y_true_ref[...].astype(jnp.float32)
    acc = jnp.zeros(y_true.shape, jnp.float32)
    # Static unroll over quantiles (a_coefs / b_coefs are Python floats with the
    # factor 2, per-quantile weight and the mean-over-Q already folded in).
    for i in range(len(a_coefs)):
        d = y_true - y_pred_ref[i].astype(jnp.float32)
        acc = acc + jnp.maximum(a_coefs[i] * d, b_coefs[i] * d)
    if scale != 1.0:
        acc = acc * scale
    if has_sw:
        acc = acc * sw_ref[...].astype(jnp.float32)
    # NOTE: zero-padded tail elements stay exactly 0 because max(a*0, b*0) == 0 and
    # sw pads are 0 too; keep it that way (no bias/eps in here) -- pads are sliced off.
    out_ref[...] = acc.astype(out_ref.dtype)


def _vmem_budget_bytes():
    # Conservative, generation-aware budget for the double-buffered tile footprint
    # plus f32 spill temporaries (scoped VMEM default: 16 MiB v5e, 32 MiB v6e/v7x).
    try:
        kind = jax.devices()[0].device_kind.lower()
    except Exception:
        kind = ""
    if ("v6" in kind) or ("7" in kind):
        return 24 * 1024 * 1024
    return 12 * 1024 * 1024


def _pick_tile_rows(rows_needed, lanes, n, max_tile_rows):
    """Pick tile_rows: >= 2 grid steps when reasonable, never force padding to get them."""
    pad_free = (rows_needed * lanes == n)

    if rows_needed < 16:  # cannot make two >= 8-row tiles
        return rows_needed if rows_needed <= max_tile_rows else max_tile_rows

    two_step = min(max_tile_rows, _round_up(pl.cdiv(rows_needed, 2), 8))
    if not pad_free:
        # Padding (a full jnp.pad copy) happens anyway -> split freely.
        return two_step

    # Pad-free slab: only split with a multiple-of-8 divisor of rows_needed that is
    # not so small that the ~0.35us per-grid-step overhead dominates.
    floor = max(8, min(max_tile_rows // 8, rows_needed // 64))
    upper = min(max_tile_rows, rows_needed // 2) // 8 * 8
    for tr in range(upper, floor - 1, -8):
        if rows_needed % tr == 0:
            return tr
    if rows_needed <= max_tile_rows:
        return rows_needed  # single pad-free tile (keeps zero-copy wrapper)
    return two_step         # too big for one tile: give up pad-freedom


def _choose_tiling(n, num_q, has_sw, itemsize):
    # lanes: prefer a value that divides n so no jnp.pad / output-slice copy is needed.
    lanes = None
    for cand in (1024, 512, 256, 128):
        if n % cand == 0:
            lanes = cand
            break
    if lanes is None:
        lanes = min(512, _round_up(n, 128))
    rows_needed = pl.cdiv(n, lanes)

    # Footprint model per tile element: double-buffered IO slabs (io dtype) plus
    # ~3 live f32 vector temporaries (y_true, acc, d) that spill to VMEM.
    n_slabs = num_q + 2 + (1 if has_sw else 0)
    bytes_per_elem = 2 * n_slabs * max(int(itemsize), 2) + 12
    max_tile_elems = max(8 * 128, _vmem_budget_bytes() // bytes_per_elem)
    max_tile_rows = max(8, (max_tile_elems // lanes) // 8 * 8)

    tile_rows = _pick_tile_rows(rows_needed, lanes, n, max_tile_rows)
    grid_steps = pl.cdiv(rows_needed, tile_rows)
    rows = tile_rows * grid_steps
    return lanes, rows, tile_rows, grid_steps


def quantile_loss(y_true, y_pred, quantiles, quantile_weights=None, sample_weight=None):
    """Forward of QuantileLoss.

    y_true: any shape (e.g. (B, T)).
    y_pred: y_true.shape + (Q,)  (module-native layout; needs one relayout copy), or
            (Q,) + y_true.shape  (quantile-major fast path; zero relayout).
    Returns the per-element loss (mean over quantiles of the weighted pinball
    losses), optionally scaled elementwise by sample_weight.
    """
    num_q = len(quantiles)
    if not quantile_weights:
        quantile_weights = [1.0 / num_q] * num_q
    quantiles = [float(q) for q in quantiles]
    quantile_weights = [float(w) for w in quantile_weights]
    # The max(a*d, b*d) folding of the pinball loss is only valid here:
    assert all(0.0 <= q <= 1.0 for q in quantiles), "quantiles must lie in [0, 1]"
    assert all(w >= 0.0 for w in quantile_weights), "quantile_weights must be >= 0"

    orig_shape = tuple(y_true.shape)
    n = math.prod(orig_shape) if orig_shape else 1

    # Fold 2*, per-quantile weight and the mean over quantiles into constants:
    #   (1/Q) * w * 2*(q*relu(d) + (1-q)*relu(-d)) == max(a*d, b*d),  d = y_true - y_pred
    a_coefs = tuple(2.0 * w * q / num_q for q, w in zip(quantiles, quantile_weights))
    b_coefs = tuple(2.0 * w * (q - 1.0) / num_q for q, w in zip(quantiles, quantile_weights))

    # sample_weight: scalar -> fused as a constant; array -> fused as an extra input.
    # TODO(synk): the original torch code has `sample_weight * sum` (a bug, builtin
    # sum); we implement the evident intent: scale the per-element loss.
    scale = 1.0
    sw_array = None
    if sample_weight is not None:
        if isinstance(sample_weight, (int, float)):
            scale = float(sample_weight)
        else:
            sw_array = jnp.broadcast_to(jnp.asarray(sample_weight), orig_shape)
    has_sw = sw_array is not None

    itemsize = jnp.dtype(y_true.dtype).itemsize
    lanes, rows, tile_rows, grid_steps = _choose_tiling(n, num_q, has_sw, itemsize)
    n_pad = rows * lanes
    need_pad = n_pad != n

    # Lane-dense y_true slab (rows, lanes) — pure reshape, pad only if needed.
    yt_flat = y_true.reshape(-1)
    if need_pad:
        yt_flat = jnp.pad(yt_flat, (0, n_pad - n))
    yt2 = yt_flat.reshape(rows, lanes)

    # Quantile-major predictions (Q, rows, lanes).
    if y_pred.shape == orig_shape + (num_q,):
        yp_qm = jnp.moveaxis(y_pred, -1, 0).reshape(num_q, n)   # the one relayout copy
    elif y_pred.shape == (num_q,) + orig_shape:
        yp_qm = y_pred.reshape(num_q, n)                        # fast path: no relayout
    else:
        raise ValueError(
            f"y_pred shape {y_pred.shape} incompatible with y_true shape {orig_shape} "
            f"and {num_q} quantiles")
    if need_pad:
        yp_qm = jnp.pad(yp_qm, ((0, 0), (0, n_pad - n)))
    yp3 = yp_qm.reshape(num_q, rows, lanes)

    kernel = functools.partial(_quantile_loss_kernel, a_coefs=a_coefs, b_coefs=b_coefs,
                               scale=scale, has_sw=has_sw)

    in_specs = [
        pl.BlockSpec((tile_rows, lanes), lambda i: (i, 0)),
        pl.BlockSpec((num_q, tile_rows, lanes), lambda i: (0, i, 0)),
    ]
    args = [yt2, yp3]
    if has_sw:
        sw_flat = sw_array.reshape(-1)
        if need_pad:
            sw_flat = jnp.pad(sw_flat, (0, n_pad - n))
        args.append(sw_flat.reshape(rows, lanes))
        in_specs.append(pl.BlockSpec((tile_rows, lanes), lambda i: (i, 0)))

    out2 = pl.pallas_call(
        kernel,
        out_shape=jax.ShapeDtypeStruct((rows, lanes), y_true.dtype),
        grid=(grid_steps,),
        in_specs=in_specs,
        out_specs=pl.BlockSpec((tile_rows, lanes), lambda i: (i, 0)),
        compiler_params=pltpu.CompilerParams(dimension_semantics=("parallel",)),
    )(*args)

    if need_pad:
        return out2.reshape(-1)[:n].reshape(orig_shape)
    return out2.reshape(orig_shape)


def _reference_quantile_loss(y_true, y_pred, quantiles, quantile_weights=None):
    num_q = len(quantiles)
    if not quantile_weights:
        quantile_weights = [1.0 / num_q] * num_q
    losses = []
    for i, q in enumerate(quantiles):
        p = y_pred[..., i]
        under = q * jnp.maximum(y_true - p, 0.0)
        over = (1.0 - q) * jnp.maximum(p - y_true, 0.0)
        losses.append(2.0 * (under + over) * quantile_weights[i])
    return jnp.mean(jnp.stack(losses, axis=-1), axis=-1)


if __name__ == "__main__":
    # Deterministic "parameters": quantiles fixed in-script (module __init__ args).
    quantiles = [0.1, 0.5, 0.9]
    Q = len(quantiles)

    key = jax.random.PRNGKey(0)
    k1, k2, k3, k4, k5 = jax.random.split(key, 5)

    # Small module-consistent shapes: batch=4, seq=16, module-native trailing-(Q,) layout.
    B, T = 4, 16
    y_true = jax.random.normal(k1, (B, T), dtype=jnp.float32)
    y_pred = jax.random.normal(k2, (B, T, Q), dtype=jnp.float32)

    out = jax.block_until_ready(quantile_loss(y_true, y_pred, quantiles))
    ref = _reference_quantile_loss(y_true, y_pred, quantiles)
    assert out.shape == (B, T)
    assert jnp.allclose(out, ref, atol=1e-5, rtol=1e-5)

    # Fused sample_weight path (array weight).
    sw = jax.random.uniform(k3, (B, T), dtype=jnp.float32)
    out_w = jax.block_until_ready(quantile_loss(y_true, y_pred, quantiles, sample_weight=sw))
    assert jnp.allclose(out_w, ref * sw, atol=1e-5, rtol=1e-5)

    # Larger pad-free shape exercising the multi-step grid and the quantile-major
    # zero-relayout fast path.
    B2, T2 = 8, 2048
    y_true2 = jax.random.normal(k4, (B2, T2), dtype=jnp.float32)
    y_pred2_qm = jax.random.normal(k5, (Q, B2, T2), dtype=jnp.float32)
    out2 = jax.block_until_ready(quantile_loss(y_true2, y_pred2_qm, quantiles))
    ref2 = _reference_quantile_loss(y_true2, jnp.moveaxis(y_pred2_qm, 0, -1), quantiles)
    assert jnp.allclose(out2, ref2, atol=1e-5, rtol=1e-5)

    print("KERNEL_OK")
</pallas_src>

<mosaic_0001>
module attributes {stable_mosaic.version = 11 : i64} {
  func.func @_quantile_loss_kernel(%arg0: i32, %arg1: memref<1x128xf32, #tpu.memory_space<vmem>>, %arg2: memref<3x1x128xf32, #tpu.memory_space<vmem>>, %arg3: memref<1x128xf32, #tpu.memory_space<vmem>>) attributes {dimension_semantics = [#tpu.dimension_semantics<parallel>], iteration_bounds = array<i64: 1>, scalar_prefetch = 0 : i64, scratch_operands = 0 : i64, tpu.core_type = #tpu.core_type<tc>, window_params = [{transform_indices = @transform_0, window_bounds = array<i64: 1, 128>}, {transform_indices = @transform_1, window_bounds = array<i64: 3, 1, 128>}, {transform_indices = @transform_2, window_bounds = array<i64: 1, 128>}]} {
    %c0 = arith.constant 0 : index
    %c0_0 = arith.constant 0 : index
    %0 = vector.load %arg1[%c0, %c0_0] : memref<1x128xf32, #tpu.memory_space<vmem>>, vector<1x128xf32>
    %cst = arith.constant 0.000000e+00 : f32
    %1 = vector.broadcast %cst : f32 to vector<1x128xf32>
    %c0_1 = arith.constant 0 : index
    %c0_2 = arith.constant 0 : index
    %c0_3 = arith.constant 0 : index
    %2 = vector.load %arg2[%c0_1, %c0_2, %c0_3] : memref<3x1x128xf32, #tpu.memory_space<vmem>>, vector<1x1x128xf32>
    %3 = vector.shape_cast %2 : vector<1x1x128xf32> to vector<1x128xf32>
    %4 = arith.subf %0, %3 : vector<1x128xf32>
    %cst_4 = arith.constant 0.0222222228 : f32
    %5 = vector.broadcast %cst_4 : f32 to vector<1x128xf32>
    %6 = arith.mulf %5, %4 : vector<1x128xf32>
    %cst_5 = arith.constant -2.000000e-01 : f32
    %7 = vector.broadcast %cst_5 : f32 to vector<1x128xf32>
    %8 = arith.mulf %7, %4 : vector<1x128xf32>
    %9 = arith.maximumf %6, %8 : vector<1x128xf32>
    %10 = arith.addf %1, %9 : vector<1x128xf32>
    %c1 = arith.constant 1 : index
    %c0_6 = arith.constant 0 : index
    %c0_7 = arith.constant 0 : index
    %11 = vector.load %arg2[%c1, %c0_6, %c0_7] : memref<3x1x128xf32, #tpu.memory_space<vmem>>, vector<1x1x128xf32>
    %12 = vector.shape_cast %11 : vector<1x1x128xf32> to vector<1x128xf32>
    %13 = arith.subf %0, %12 : vector<1x128xf32>
    %cst_8 = arith.constant 0.111111112 : f32
    %14 = vector.broadcast %cst_8 : f32 to vector<1x128xf32>
    %15 = arith.mulf %14, %13 : vector<1x128xf32>
    %cst_9 = arith.constant -0.111111112 : f32
    %16 = vector.broadcast %cst_9 : f32 to vector<1x128xf32>
    %17 = arith.mulf %16, %13 : vector<1x128xf32>
    %18 = arith.maximumf %15, %17 : vector<1x128xf32>
    %19 = arith.addf %10, %18 : vector<1x128xf32>
    %c2 = arith.constant 2 : index
    %c0_10 = arith.constant 0 : index
    %c0_11 = arith.constant 0 : index
    %20 = vector.load %arg2[%c2, %c0_10, %c0_11] : memref<3x1x128xf32, #tpu.memory_space<vmem>>, vector<1x1x128xf32>
    %21 = vector.shape_cast %20 : vector<1x1x128xf32> to vector<1x128xf32>
    %22 = arith.subf %0, %21 : vector<1x128xf32>
    %cst_12 = arith.constant 2.000000e-01 : f32
    %23 = vector.broadcast %cst_12 : f32 to vector<1x128xf32>
    %24 = arith.mulf %23, %22 : vector<1x128xf32>
    %cst_13 = arith.constant -0.0222222228 : f32
    %25 = vector.broadcast %cst_13 : f32 to vector<1x128xf32>
    %26 = arith.mulf %25, %22 : vector<1x128xf32>
    %27 = arith.maximumf %24, %26 : vector<1x128xf32>
    %28 = arith.addf %19, %27 : vector<1x128xf32>
    %c0_14 = arith.constant 0 : index
    %c0_15 = arith.constant 0 : index
    %29 = vector.load %arg3[%c0_14, %c0_15] : memref<1x128xf32, #tpu.memory_space<vmem>>, vector<1x128xf32>
    tpu.vector_store %arg3[%c0_14, %c0_15], %28 {strides = array<i32>} : memref<1x128xf32, #tpu.memory_space<vmem>>, vector<1x128xf32>,
    return
  }
  func.func @transform_0(%arg0: i32) -> (i32, i32) {
    %c0_i32 = arith.constant 0 : i32
    %c0_i32_0 = arith.constant 0 : i32
    return %arg0, %c0_i32 : i32, i32
  }
  func.func @transform_1(%arg0: i32) -> (i32, i32, i32) {
    %c0_i32 = arith.constant 0 : i32
    %c0_i32_0 = arith.constant 0 : i32
    %c0_i32_1 = arith.constant 0 : i32
    return %c0_i32, %arg0, %c0_i32_0 : i32, i32, i32
  }
  func.func @transform_2(%arg0: i32) -> (i32, i32) {
    %c0_i32 = arith.constant 0 : i32
    %c0_i32_0 = arith.constant 0 : i32
    return %arg0, %c0_i32 : i32, i32
  }
}

</mosaic_0001>

<llo_original>
// kernel: tpu_custom_call.1
$region0: #{tpu_custom_call.1}
  #allocation0 [shape = 'u32[]', space=smem, size = 0x4, offset = 0x4, fixed_abs, tag = 'smem constant byte address 0x4 - core index']
  #allocation1 [shape = 'u32[144,128]{1,0:T(1,128)}', space=vmem, size = 0x12000, scoped, tag = 'internal scratch']
  %s0 = inlined_call_operand.hbm [shape: f32[1,128], index: 0, kind: input, shape index: {}]
  %s1 = inlined_call_operand.vmem [shape: f32[3,1,128], index: 1, kind: input, shape index: {}]
  %s2 = inlined_call_operand.hbm [shape: f32[1,128], index: 2, kind: output, shape index: {}]
  %s3 = sld [smem:[#allocation0]]
  $region22: #{tpu_custom_call.1} parent=0
    _
  %s5 = ssub.s32 1, %s3
  %s6 = scalar_select 0, %s5, %s3
  $region1: #{tpu_custom_call.1} parent=0
    #allocation2 [shape = 'u8[512]{0}', space=vmem, size = 0x400, scoped, tag = 'input window, operand 0, single buffered']
    #allocation3 [shape = 's32[1]{0}', space=sflag, size = 0x4, scoped, tag = 'scoped memory for tpu_custom_call.1']
    #allocation4 [shape = 's32[1]{0}', space=sflag, size = 0x4, scoped, tag = 'scoped memory for tpu_custom_call.1']
    #allocation5 [shape = 'u8[512]{0}', space=vmem, size = 0x400, scoped, tag = 'output window, operand 0, single buffered']
    %7 = vsyncpa [#allocation3], 0
    %8 = vsyncpa [#allocation4], 0
    // Predicated region
    $region2: #{tpu_custom_call.1} parent=1 // pred_check
      _
    $region3: #{tpu_custom_call.1} parent=1 // pred_check_branch
      %10 = sbr.rel (0) target = $region5
    $region4: #{tpu_custom_call.1} parent=1 // pred_region
      %s12 = ssub.s32 16, 16
      %13 = vsyncadd [#allocation3], %s12
      %s15 = sshll.u32 [#allocation2], 4
      %s16 = int_to_ptr.vmem [resolvable:$true] %s15
      %18 = dma.hbm_to_vmem [thread:$0]  %s0, 16, %s16, [#allocation3]
    $region5: #{tpu_custom_call.1} parent=1 // pred_fallthru
      _
    // Predicated region
    $region6: #{tpu_custom_call.1} parent=1 // pred_check
      _
    $region7: #{tpu_custom_call.1} parent=1 // pred_check_branch
      %20 = sbr.rel (0) target = $region9
    $region8: #{tpu_custom_call.1} parent=1 // pred_region
      _
    $region9: #{tpu_custom_call.1} parent=1 // pred_fallthru
      _
    // Predicated region
    $region10: #{tpu_custom_call.1} parent=1 // pred_check
      _
    $region11: #{tpu_custom_call.1} parent=1 // pred_check_branch
      %22 = sbr.rel (0) target = $region13
    $region12: #{tpu_custom_call.1} parent=1 // pred_region
      %23 = dma.done [#allocation3], 16
    $region13: #{tpu_custom_call.1} parent=1 // pred_fallthru
      _
    %v24 = vld [vmem:[#allocation2] sm:$0x1]
    %v25 = vld [vmem:[%s1] sm:$0x1]
    %v26 = vsub.f32 %v24, %v25
    %v27 = vmul.f32 %v26, 0.022222223
    %v28 = vmul.f32 %v26, -0.2
    %v29 = vmax.f32 %v27, %v28
    %v30 = vadd.f32 %v29, 0.0
    %s31 = scalar_lea.vmem %s1, 1
    %v32 = vld [vmem:[%s31] sm:$0x1]
    %v33 = vsub.f32 %v24, %v32
    %v34 = vmul.f32 %v33, 0.11111111
    %v35 = vmul.f32 %v33, -0.11111111
    %v36 = vmax.f32 %v34, %v35
    %v37 = vadd.f32 %v30, %v36
    %s38 = scalar_lea.vmem %s1, 2
    %v39 = vld [vmem:[%s38] sm:$0x1]
    %v40 = vsub.f32 %v24, %v39
    %v41 = vmul.f32 %v40, 0.2
    %v42 = vmul.f32 %v40, -0.022222223
    %v43 = vmax.f32 %v41, %v42
    %v44 = vadd.f32 %v37, %v43
    %45 = vst [vmem:[#allocation5] sm:$0x1] %v44
    // Predicated region
    $region14: #{tpu_custom_call.1} parent=1 // pred_check
      _
    $region15: #{tpu_custom_call.1} parent=1 // pred_check_branch
      %47 = sbr.rel (0) target = $region17
    $region16: #{tpu_custom_call.1} parent=1 // pred_region
      %s49 = ssub.s32 16, 16
      %50 = vsyncadd [#allocation4], %s49
      %s52 = sshll.u32 [#allocation5], 4
      %s53 = int_to_ptr.vmem [resolvable:$true] %s52
      %55 = dma.vmem_to_hbm [thread:$0]  %s53, 16, %s2, [#allocation4]
    $region17: #{tpu_custom_call.1} parent=1 // pred_fallthru
      _
    // Predicated region
    $region18: #{tpu_custom_call.1} parent=1 // pred_check
      _
    $region19: #{tpu_custom_call.1} parent=1 // pred_check_branch
      %57 = sbr.rel (0) target = $region21
    $region20: #{tpu_custom_call.1} parent=1 // pred_region
      %58 = dma.done [#allocation4], 16
    $region21: #{tpu_custom_call.1} parent=1 // pred_fallthru
      _
    %59 = vsyncpa [#allocation3], 1
    %60 = vsyncpa [#allocation4], 1

</llo_original>
